<compile_context>
chip_gen: v7x
topology: tpu7x:2x2x1
jax: 0.10.0
libtpu: 0.0.40
codegen_flags: <defaults>
</compile_context>

<pallas_src>
import jax
import jax.numpy as jnp
from jax.experimental import pallas as pl
from jax.experimental.pallas import tpu as pltpu

EPS = 1e-5
_VMEM_BUDGET = None


def _round_up(x, m):
    return (x + m - 1) // m * m


def _vmem_budget():
    """Generation-aware scoped-VMEM budget (~3/4 of capacity, capped at 100 MiB)."""
    global _VMEM_BUDGET
    if _VMEM_BUDGET is None:
        cap = 64 * 1024 * 1024
        try:
            got = int(pltpu.get_tpu_info().vmem_capacity_bytes)
            if got > 0:
                cap = got
        except Exception:
            pass
        _VMEM_BUDGET = min((3 * cap) // 4, 100 * 1024 * 1024)
    return _VMEM_BUDGET


# ----------------------------------------------------------------------------
# Pallas kernels
# ----------------------------------------------------------------------------
def _make_matmul_act_kernel(do_relu, do_tanh):
    """Matmul + activation for layers without BatchNorm (dec1)."""
    def kernel(p_ref, w_ref, o_ref):
        y = jnp.dot(p_ref[0], w_ref[0], preferred_element_type=jnp.float32)
        if do_relu:
            y = jnp.maximum(y, 0.0)
        if do_tanh:
            y = jnp.tanh(y)
        o_ref[0] = y.astype(o_ref.dtype)
    return kernel


def _make_fused_bn_kernel(do_relu, do_tanh, has_residual, inv_m, n_tiles):
    """Single-call conv+BN(+ReLU/residual/tanh).

    Grid = (phase, group, m_tile), all "arbitrary":
      phase 0: matmul tile -> VMEM scratch, accumulate column sum / ssq,
      phase 1: (first step) fold BN scale/shift, then normalize each tile in
               VMEM and emit the lane-dense output tile.
    """
    def kernel(*refs):
        if has_residual:
            (p_ref, w_ref, g_ref, b_ref, r_ref, o_ref,
             y_sc, sum_sc, ssq_sc, scale_sc, shift_sc) = refs
        else:
            (p_ref, w_ref, g_ref, b_ref, o_ref,
             y_sc, sum_sc, ssq_sc, scale_sc, shift_sc) = refs
        phase = pl.program_id(0)
        slot = pl.program_id(1) * n_tiles + pl.program_id(2)

        @pl.when(phase == 0)
        def _matmul_and_stats():
            @pl.when(slot == 0)
            def _init():
                sum_sc[...] = jnp.zeros_like(sum_sc)
                ssq_sc[...] = jnp.zeros_like(ssq_sc)

            y = jnp.dot(p_ref[0], w_ref[0], preferred_element_type=jnp.float32)
            y_sc[slot] = y
            sum_sc[...] += jnp.sum(y, axis=0, keepdims=True)
            ssq_sc[...] += jnp.sum(y * y, axis=0, keepdims=True)

        @pl.when(phase == 1)
        def _normalize():
            @pl.when(slot == 0)
            def _fold():
                mean = sum_sc[...] * inv_m
                var = jnp.maximum(ssq_sc[...] * inv_m - mean * mean, 0.0)
                inv = jax.lax.rsqrt(var + EPS)
                scale_sc[...] = g_ref[...] * inv
                shift_sc[...] = b_ref[...] - mean * g_ref[...] * inv

            y = y_sc[slot] * scale_sc[...] + shift_sc[...]
            if do_relu:
                y = jnp.maximum(y, 0.0)
            if has_residual:
                y = y + r_ref[0].astype(jnp.float32)
            if do_tanh:
                y = jnp.tanh(y)
            o_ref[0] = y.astype(o_ref.dtype)
    return kernel


def _matmul_stats_kernel(p_ref, w_ref, y_ref, stats_ref):
    """Two-pass fallback, pass A: matmul (bf16 in, f32 acc), bf16 y store,
    per-tile column sum / sum-of-squares kept in f32."""
    y = jnp.dot(p_ref[0], w_ref[0], preferred_element_type=jnp.float32)
    y_ref[0] = y.astype(y_ref.dtype)
    col_sum = jnp.sum(y, axis=0, keepdims=True)
    col_ssq = jnp.sum(y * y, axis=0, keepdims=True)
    pad = jnp.zeros((6, y.shape[1]), jnp.float32)
    stats_ref[...] = jnp.concatenate([col_sum, col_ssq, pad],
                                     axis=0).reshape(stats_ref.shape)


def _make_finalize_kernel(do_relu, do_tanh, has_residual):
    """Two-pass fallback, pass B: BN affine (pre-folded) + ReLU + residual + tanh."""
    def kernel(*refs):
        y_ref, scale_ref, shift_ref = refs[0], refs[1], refs[2]
        idx = 3
        r_ref = None
        if has_residual:
            r_ref = refs[idx]
            idx += 1
        o_ref = refs[idx]

        y = y_ref[0].astype(jnp.float32) * scale_ref[...] + shift_ref[...]
        if do_relu:
            y = jnp.maximum(y, 0.0)
        if has_residual:
            y = y + r_ref[0].astype(jnp.float32)
        if do_tanh:
            y = jnp.tanh(y)
        o_ref[0] = y.astype(o_ref.dtype)
    return kernel


# ----------------------------------------------------------------------------
# Fused conv block wrapper
# ----------------------------------------------------------------------------
def fused_conv(patches, w2d, gamma=None, beta=None, residual=None,
               do_relu=False, do_tanh=False, out_dtype=jnp.bfloat16,
               force_two_pass=False):
    """patches[G,M,K] @ w2d[G,K,C] -> BN(batch stats over all G*M rows)
    -> ReLU -> (+residual) -> tanh.  Returns [G, M, C_pad] (channel-padded)."""
    G, M, K = patches.shape
    C = w2d.shape[-1]
    K_pad = _round_up(K, 128)
    C_pad = _round_up(C, 128)
    out_bytes = jnp.dtype(out_dtype).itemsize
    budget = _vmem_budget()

    # Tile sizing from the VMEM budget (double-buffered streaming blocks).
    per_row = 2 * (K_pad * 2 + C_pad * out_bytes
                   + (C_pad * 2 if residual is not None else 0))
    fixed = 2 * K_pad * C_pad * 2 + 64 * C_pad * 4
    m16 = _round_up(M, 16)
    TM = min(1024, m16)
    while TM > 128 and fixed + per_row * TM > budget // 2:
        TM = max(128, TM // 2)
    if gamma is None and G == 1 and TM == m16 and m16 >= 256:
        # keep >=2 grid steps so a second TensorCore (v7x) has work
        TM = _round_up((m16 + 1) // 2, 16)
    M_pad = _round_up(M, TM)
    n_tiles = M_pad // TM

    p = jnp.pad(patches.astype(jnp.bfloat16),
                ((0, 0), (0, M_pad - M), (0, K_pad - K)))
    w = jnp.pad(w2d.astype(jnp.bfloat16),
                ((0, 0), (0, K_pad - K), (0, C_pad - C)))

    p_spec = pl.BlockSpec((1, TM, K_pad), lambda g, i: (g, i, 0))
    w_spec = pl.BlockSpec((1, K_pad, C_pad), lambda g, i: (g, 0, 0))
    row_spec = pl.BlockSpec((1, TM, C_pad), lambda g, i: (g, i, 0))
    vec_spec = pl.BlockSpec((1, C_pad), lambda g, i: (0, 0))

    if gamma is None:
        out = pl.pallas_call(
            _make_matmul_act_kernel(do_relu, do_tanh),
            out_shape=jax.ShapeDtypeStruct((G, M_pad, C_pad), out_dtype),
            grid=(G, n_tiles),
            in_specs=[p_spec, w_spec],
            out_specs=row_spec,
            compiler_params=pltpu.CompilerParams(
                dimension_semantics=("parallel", "parallel"),
                vmem_limit_bytes=budget),
        )(p, w)
        return out[:, :M, :]

    gm = jnp.pad(gamma.astype(jnp.float32), (0, C_pad - C)).reshape(1, C_pad)
    bt = jnp.pad(beta.astype(jnp.float32), (0, C_pad - C)).reshape(1, C_pad)
    res = None
    if residual is not None:
        Cr = residual.shape[-1]
        res = jnp.pad(residual.astype(jnp.bfloat16),
                      ((0, 0), (0, M_pad - M), (0, C_pad - Cr)))
    inv_m = 1.0 / float(G * M)   # zero-padded rows contribute nothing -> exact
    n_slots = G * n_tiles

    # --- fused single-call path: pre-BN activation never leaves VMEM --------
    fused_bytes = (n_slots * TM * C_pad * 4          # y scratch (f32)
                   + fixed + per_row * TM            # streamed blocks + weight
                   + 4 * 8 * C_pad * 4)              # stats / scale / shift
    if (not force_two_pass) and fused_bytes <= budget:
        in_specs = [
            pl.BlockSpec((1, TM, K_pad),
                         lambda ph, g, i: ((1 - ph) * g, (1 - ph) * i, 0)),
            pl.BlockSpec((1, K_pad, C_pad),
                         lambda ph, g, i: ((1 - ph) * g, 0, 0)),
            pl.BlockSpec((1, C_pad), lambda ph, g, i: (0, 0)),
            pl.BlockSpec((1, C_pad), lambda ph, g, i: (0, 0)),
        ]
        inputs = [p, w, gm, bt]
        if res is not None:
            in_specs.append(
                pl.BlockSpec((1, TM, C_pad),
                             lambda ph, g, i: (ph * g, ph * i, 0)))
            inputs.append(res)
        out = pl.pallas_call(
            _make_fused_bn_kernel(do_relu, do_tanh, res is not None,
                                  inv_m, n_tiles),
            out_shape=jax.ShapeDtypeStruct((G, M_pad, C_pad), out_dtype),
            grid=(2, G, n_tiles),
            in_specs=in_specs,
            out_specs=pl.BlockSpec((1, TM, C_pad),
                                   lambda ph, g, i: (ph * g, ph * i, 0)),
            scratch_shapes=[pltpu.VMEM((n_slots, TM, C_pad), jnp.float32),
                            pltpu.VMEM((1, C_pad), jnp.float32),
                            pltpu.VMEM((1, C_pad), jnp.float32),
                            pltpu.VMEM((1, C_pad), jnp.float32),
                            pltpu.VMEM((1, C_pad), jnp.float32)],
            compiler_params=pltpu.CompilerParams(
                dimension_semantics=("arbitrary", "arbitrary", "arbitrary"),
                vmem_limit_bytes=budget),
        )(*inputs)
        return out[:, :M, :]

    # --- two-pass fallback (activation too big for VMEM): bf16 y round trip --
    y, stats = pl.pallas_call(
        _matmul_stats_kernel,
        out_shape=(jax.ShapeDtypeStruct((G, M_pad, C_pad), jnp.bfloat16),
                   jax.ShapeDtypeStruct((G, n_tiles, 8, C_pad), jnp.float32)),
        grid=(G, n_tiles),
        in_specs=[p_spec, w_spec],
        out_specs=(row_spec,
                   pl.BlockSpec((1, 1, 8, C_pad), lambda g, i: (g, i, 0, 0))),
        compiler_params=pltpu.CompilerParams(
            dimension_semantics=("parallel", "parallel"),
            vmem_limit_bytes=budget),
    )(p, w)

    # Tiny cross-tile reduction and scale/shift folding (plain JAX, f32 stats).
    col_sum = jnp.sum(stats[:, :, 0, :], axis=(0, 1))
    col_ssq = jnp.sum(stats[:, :, 1, :], axis=(0, 1))
    mean = col_sum * inv_m
    var = jnp.maximum(col_ssq * inv_m - mean * mean, 0.0)
    inv = jax.lax.rsqrt(var + EPS)
    scale = (gm[0] * inv).reshape(1, C_pad)
    shift = (bt[0] - mean * gm[0] * inv).reshape(1, C_pad)

    inputs = [y, scale, shift]
    in_specs = [row_spec, vec_spec, vec_spec]
    if res is not None:
        inputs.append(res)
        in_specs.append(row_spec)

    out = pl.pallas_call(
        _make_finalize_kernel(do_relu, do_tanh, res is not None),
        out_shape=jax.ShapeDtypeStruct((G, M_pad, C_pad), out_dtype),
        grid=(G, n_tiles),
        in_specs=in_specs,
        out_specs=row_spec,
        compiler_params=pltpu.CompilerParams(
            dimension_semantics=("parallel", "parallel"),
            vmem_limit_bytes=budget),
    )(*inputs)
    return out[:, :M, :]


# ----------------------------------------------------------------------------
# Plain-JAX glue: padding / im2col / sub-pixel phases (data movement only)
# TODO(synk): build im2col patches inside the kernel from a halo'd NHWC tile.
# ----------------------------------------------------------------------------
def _im2col(x_pad, kh, kw, stride):
    """x_pad: [N, Hp, Wp, C] -> patches [N*Ho*Wo, kh*kw*C] (HWIO column order)."""
    N, Hp, Wp, C = x_pad.shape
    Ho = (Hp - kh) // stride + 1
    Wo = (Wp - kw) // stride + 1
    cols = []
    for i in range(kh):
        for j in range(kw):
            cols.append(
                x_pad[:, i:i + (Ho - 1) * stride + 1:stride,
                      j:j + (Wo - 1) * stride + 1:stride, :])
    patches = jnp.concatenate(cols, axis=-1)        # [N, Ho, Wo, kh*kw*C]
    return patches.reshape(N * Ho * Wo, kh * kw * C), (N, Ho, Wo)


def _pad_weight_in(w, ci_act):
    """Zero-pad the input-channel dim of an HWIO weight to match a
    channel-padded activation (padded activation channels are zero -> exact)."""
    ci_w = w.shape[2]
    if ci_act > ci_w:
        w = jnp.pad(w, ((0, 0), (0, 0), (0, ci_act - ci_w), (0, 0)))
    return w


def cnr2d(x, prm, k, s, p, relu, tanh=False, pad_mode='constant',
          residual=None, out_dtype=jnp.bfloat16):
    """Conv2d (+ BatchNorm + ReLU), NHWC activations, channel-padded carry."""
    w = _pad_weight_in(prm['w'], x.shape[-1])
    if p > 0:
        x = jnp.pad(x, ((0, 0), (p, p), (p, p), (0, 0)), mode=pad_mode)
    patches, (N, Ho, Wo) = _im2col(x, k, k, s)
    w2d = w.reshape(-1, w.shape[-1])
    res = None if residual is None else residual.reshape(1, N * Ho * Wo, -1)
    out = fused_conv(patches[None], w2d[None],
                     gamma=prm.get('gamma'), beta=prm.get('beta'),
                     residual=res, do_relu=relu, do_tanh=tanh,
                     out_dtype=out_dtype)
    return out.reshape(N, Ho, Wo, out.shape[-1])


def decnr2d(x, prm, k, s, p, relu):
    """ConvTranspose2d(k=4, s=2, p=1) via the s^2-phase sub-pixel decomposition.
    prm['w'] is stored as the equivalent stride-1 HWIO conv weight of the
    zero-dilated formulation; BN stats are shared over all four phases."""
    assert k == 4 and s == 2 and p == 1
    w = _pad_weight_in(prm['w'], x.shape[-1])        # (4, 4, Ci_act, Co)
    co = w.shape[-1]
    N, H, W, _ = x.shape
    xpad = jnp.pad(x, ((0, 0), (1, 1), (1, 1), (0, 0)))
    patch_list, w_list = [], []
    for a in range(2):
        for b in range(2):
            pmat, _ = _im2col(xpad[:, a:a + H + 1, b:b + W + 1, :], 2, 2, 1)
            patch_list.append(pmat)                  # (N*H*W, 4*Ci)
            w_list.append(w[a::2, b::2, :, :].reshape(-1, co))
    patches = jnp.stack(patch_list, axis=0)          # (4, N*H*W, 4*Ci)
    w2d = jnp.stack(w_list, axis=0)                  # (4, 4*Ci, Co)
    out = fused_conv(patches, w2d, gamma=prm['gamma'], beta=prm['beta'],
                     do_relu=relu)
    c_pad = out.shape[-1]
    out = out.reshape(2, 2, N, H, W, c_pad)          # (a, b, N, H, W, C)
    out = jnp.transpose(out, (2, 3, 0, 4, 1, 5)).reshape(N, 2 * H, 2 * W, c_pad)
    return out


def resblock(x, prm):
    h = cnr2d(x, prm['c1'], k=3, s=1, p=1, relu=True, pad_mode='reflect')
    # second conv: BN, no relu, residual add fused in the kernel
    h = cnr2d(h, prm['c2'], k=3, s=1, p=1, relu=False, pad_mode='reflect',
              residual=x)
    return h


# ----------------------------------------------------------------------------
# Generator forward (mirrors the PyTorch module)
# ----------------------------------------------------------------------------
def generator_forward(params, x_nchw, y, noise_key):
    x = jnp.transpose(x_nchw, (0, 2, 3, 1))                     # NCHW -> NHWC
    noise = jax.random.normal(noise_key, x.shape, x.dtype)      # randn_like(x)
    x = jnp.concatenate([x, noise], axis=-1)                    # cat on channels

    x = cnr2d(x, params['enc1'], k=7, s=1, p=3, relu=True)
    x = cnr2d(x, params['enc2'], k=4, s=2, p=1, relu=True)
    x = cnr2d(x, params['enc3'], k=4, s=2, p=1, relu=True)

    B, H, W, _ = x.shape
    c_enc3 = params['enc3']['w'].shape[-1]
    # TODO(synk): keep the attribute channel in the padding lanes (or as a
    #             rank-1 bias-style term) instead of slicing back here.
    x = x[..., :c_enc3]
    y_pad = jnp.concatenate(
        [y, jnp.zeros((y.shape[0], H * W - y.shape[1]), y.dtype)], axis=-1)
    y_map = y_pad.reshape(B, H, W, 1)                           # == (B,1,H,W) NCHW
    x = jnp.concatenate([x, y_map.astype(x.dtype)], axis=-1)

    for rb in params['res']:
        x = resblock(x, rb)

    x = decnr2d(x, params['dec3'], k=4, s=2, p=1, relu=True)
    x = decnr2d(x, params['dec2'], k=4, s=2, p=1, relu=True)
    x = cnr2d(x, params['dec1'], k=7, s=1, p=3, relu=False, tanh=True,
              out_dtype=jnp.float32)

    c_out = params['dec1']['w'].shape[-1]
    x = x[..., :c_out]
    return jnp.transpose(x, (0, 3, 1, 2))                       # back to NCHW


# ----------------------------------------------------------------------------
# Deterministic parameter init (shapes from Generator.__init__)
# ----------------------------------------------------------------------------
def init_params(key, num_channels_in, num_channels_out, nk, n_res):
    keys = iter(jax.random.split(key, 4 + 2 * n_res + 8))

    def conv_p(ci, co, k, norm=True):
        p = {'w': 0.02 * jax.random.normal(next(keys), (k, k, ci, co), jnp.float32)}
        if norm:  # BatchNorm2d default init: gamma=1, beta=0
            p['gamma'] = jnp.ones((co,), jnp.float32)
            p['beta'] = jnp.zeros((co,), jnp.float32)
        return p

    return {
        'enc1': conv_p(num_channels_in, nk, 7),
        'enc2': conv_p(nk, 2 * nk, 4),
        'enc3': conv_p(2 * nk, 4 * nk, 4),
        'res': [{'c1': conv_p(4 * nk + 1, 4 * nk + 1, 3),
                 'c2': conv_p(4 * nk + 1, 4 * nk + 1, 3)} for _ in range(n_res)],
        'dec3': conv_p(4 * nk + 1, 2 * nk, 4),   # transposed conv, stored as the
        'dec2': conv_p(2 * nk, nk, 4),           # equivalent HWIO conv weight
        'dec1': conv_p(nk, num_channels_out, 7, norm=False),
    }


if __name__ == "__main__":
    key = jax.random.PRNGKey(0)
    k_param, k_x, k_y, k_noise = jax.random.split(key, 4)

    # --- unit check: both BN-conv paths against a plain-JAX reference -------
    def bn_conv_ref(pm, wm, g, b, rm):
        yy = jnp.einsum('gmk,gkc->gmc', pm.astype(jnp.float32),
                        wm.astype(jnp.float32))
        mean = jnp.mean(yy, axis=(0, 1))
        var = jnp.mean(jnp.square(yy), axis=(0, 1)) - mean * mean
        yn = (yy - mean) * jax.lax.rsqrt(var + EPS) * g + b
        return jnp.maximum(yn, 0.0) + rm.astype(jnp.float32)

    kp, kw, kg, kb, kr = jax.random.split(jax.random.PRNGKey(1), 5)
    pm = jax.random.normal(kp, (2, 64, 48), jnp.float32).astype(jnp.bfloat16)
    wm = jax.random.normal(kw, (2, 48, 24), jnp.float32).astype(jnp.bfloat16)
    gv = jax.random.normal(kg, (24,), jnp.float32)
    bv = jax.random.normal(kb, (24,), jnp.float32)
    rm = jax.random.normal(kr, (2, 64, 24), jnp.float32).astype(jnp.bfloat16)
    ref = bn_conv_ref(pm, wm, gv, bv, rm)
    for force in (False, True):   # fused single-call path and two-pass fallback
        got = fused_conv(pm, wm, gamma=gv, beta=bv, residual=rm,
                         do_relu=True, out_dtype=jnp.float32,
                         force_two_pass=force)[:, :, :24]
        got = jax.block_until_ready(got)
        assert jnp.allclose(got, ref, atol=7e-2, rtol=7e-2), \
            float(jnp.max(jnp.abs(got - ref)))

    # --- full Generator forward ----------------------------------------------
    B, C_img, H, W = 2, 4, 16, 16
    n_attrs = 5
    nk = 8                                   # num_channels_ker (small for test)
    num_channels_in = 2 * C_img              # x concatenated with randn_like(x)
    num_channels_out = 4
    res_blocks_num = 6

    params = init_params(k_param, num_channels_in, num_channels_out, nk,
                         res_blocks_num)

    x = jax.random.normal(k_x, (B, C_img, H, W), jnp.float32)   # NCHW like PyTorch
    y = jax.random.normal(k_y, (B, n_attrs), jnp.float32)

    fwd = jax.jit(generator_forward)
    out = jax.block_until_ready(fwd(params, x, y, k_noise))

    assert out.shape == (B, num_channels_out, H, W), out.shape
    assert bool(jnp.all(jnp.isfinite(out)))
    assert bool(jnp.all(jnp.abs(out) <= 1.0))   # tanh output range
    print("KERNEL_OK")
</pallas_src>

<mosaic_0001>
module attributes {stable_mosaic.version = 11 : i64} {
  func.func @kernel(%arg0: i32, %arg1: i32, %arg2: i32, %arg3: memref<1x64x128xbf16, #tpu.memory_space<vmem>>, %arg4: memref<1x128x128xbf16, #tpu.memory_space<vmem>>, %arg5: memref<1x128xf32, #tpu.memory_space<vmem>>, %arg6: memref<1x128xf32, #tpu.memory_space<vmem>>, %arg7: memref<1x64x128xbf16, #tpu.memory_space<vmem>>, %arg8: memref<1x64x128xf32, #tpu.memory_space<vmem>>, %arg9: memref<2x64x128xf32, #tpu.memory_space<vmem>>, %arg10: memref<1x128xf32, #tpu.memory_space<vmem>>, %arg11: memref<1x128xf32, #tpu.memory_space<vmem>>, %arg12: memref<1x128xf32, #tpu.memory_space<vmem>>, %arg13: memref<1x128xf32, #tpu.memory_space<vmem>>) attributes {dimension_semantics = [#tpu.dimension_semantics<arbitrary>, #tpu.dimension_semantics<arbitrary>, #tpu.dimension_semantics<arbitrary>], iteration_bounds = array<i64: 2, 2, 1>, scalar_prefetch = 0 : i64, scratch_operands = 5 : i64, tpu.core_type = #tpu.core_type<tc>, window_params = [{transform_indices = @transform_0, window_bounds = array<i64: 1, 64, 128>}, {transform_indices = @transform_1, window_bounds = array<i64: 1, 128, 128>}, {pipeline_mode = #tpu.pipeline_mode<synchronous>, transform_indices = @transform_2, window_bounds = array<i64: 1, 128>}, {pipeline_mode = #tpu.pipeline_mode<synchronous>, transform_indices = @transform_3, window_bounds = array<i64: 1, 128>}, {transform_indices = @transform_4, window_bounds = array<i64: 1, 64, 128>}, {transform_indices = @transform_5, window_bounds = array<i64: 1, 64, 128>}]} {
    %c1_i32 = arith.constant 1 : i32
    %0 = arith.muli %arg1, %c1_i32 : i32
    %1 = arith.addi %0, %arg2 : i32
    %c0_i32 = arith.constant 0 : i32
    %2 = arith.cmpi eq, %arg0, %c0_i32 : i32
    %3 = arith.extui %2 : i1 to i32
    %c0_i32_0 = arith.constant 0 : i32
    %4 = arith.cmpi ne, %3, %c0_i32_0 : i32
    scf.if %4 {
      %c0_i32_3 = arith.constant 0 : i32
      %8 = arith.cmpi eq, %1, %c0_i32_3 : i32
      %9 = arith.extui %8 : i1 to i32
      %c0_i32_4 = arith.constant 0 : i32
      %10 = arith.cmpi ne, %9, %c0_i32_4 : i32
      scf.if %10 {
        %cst_22 = arith.constant 0.000000e+00 : f32
        %31 = vector.broadcast %cst_22 : f32 to vector<1x128xf32>
        %c0_23 = arith.constant 0 : index
        %c0_24 = arith.constant 0 : index
        %32 = vector.load %arg10[%c0_23, %c0_24] : memref<1x128xf32, #tpu.memory_space<vmem>>, vector<1x128xf32>
        tpu.vector_store %arg10[%c0_23, %c0_24], %31 {strides = array<i32>} : memref<1x128xf32, #tpu.memory_space<vmem>>, vector<1x128xf32>,
        %cst_25 = arith.constant 0.000000e+00 : f32
        %33 = vector.broadcast %cst_25 : f32 to vector<1x128xf32>
        %c0_26 = arith.constant 0 : index
        %c0_27 = arith.constant 0 : index
        %34 = vector.load %arg11[%c0_26, %c0_27] : memref<1x128xf32, #tpu.memory_space<vmem>>, vector<1x128xf32>
        tpu.vector_store %arg11[%c0_26, %c0_27], %33 {strides = array<i32>} : memref<1x128xf32, #tpu.memory_space<vmem>>, vector<1x128xf32>,
      } else {
      }
      %c0 = arith.constant 0 : index
      %c0_5 = arith.constant 0 : index
      %c0_6 = arith.constant 0 : index
      %11 = vector.load %arg3[%c0, %c0_5, %c0_6] : memref<1x64x128xbf16, #tpu.memory_space<vmem>>, vector<1x64x128xbf16>
      %12 = vector.shape_cast %11 : vector<1x64x128xbf16> to vector<64x128xbf16>
      %c0_7 = arith.constant 0 : index
      %c0_8 = arith.constant 0 : index
      %c0_9 = arith.constant 0 : index
      %13 = vector.load %arg4[%c0_7, %c0_8, %c0_9] : memref<1x128x128xbf16, #tpu.memory_space<vmem>>, vector<1x128x128xbf16>
      %14 = vector.shape_cast %13 : vector<1x128x128xbf16> to vector<128x128xbf16>
      %cst = arith.constant dense<0.000000e+00> : vector<64x128xf32>
      %15 = tpu.matmul %12, %14, %cst {dimension_numbers = #tpu.dot_dimension_numbers<[1], [0], [0], [1], [0, 0, 1, 1], [], []>} : vector<64x128xbf16>, vector<128x128xbf16>, vector<64x128xf32> -> vector<64x128xf32>
      %16 = arith.index_cast %1 : i32 to index
      %c0_10 = arith.constant 0 : index
      %c0_11 = arith.constant 0 : index
      %17 = vector.load %arg9[%16, %c0_10, %c0_11] : memref<2x64x128xf32, #tpu.memory_space<vmem>>, vector<1x64x128xf32>
      %18 = vector.shape_cast %17 : vector<1x64x128xf32> to vector<64x128xf32>
      %19 = vector.shape_cast %15 : vector<64x128xf32> to vector<1x64x128xf32>
      tpu.vector_store %arg9[%16, %c0_10, %c0_11], %19 {strides = array<i32>} : memref<2x64x128xf32, #tpu.memory_space<vmem>>, vector<1x64x128xf32>,
      %c0_12 = arith.constant 0 : index
      %c0_13 = arith.constant 0 : index
      %20 = vector.load %arg10[%c0_12, %c0_13] : memref<1x128xf32, #tpu.memory_space<vmem>>, vector<1x128xf32>
      %cst_14 = arith.constant dense<0.000000e+00> : vector<128xf32>
      %21 = vector.multi_reduction <add>, %15, %cst_14 [0] : vector<64x128xf32> to vector<128xf32>
      %22 = vector.shape_cast %21 : vector<128xf32> to vector<1x128xf32>
      %23 = arith.addf %20, %22 : vector<1x128xf32>
      %c0_15 = arith.constant 0 : index
      %c0_16 = arith.constant 0 : index
      %24 = vector.load %arg10[%c0_15, %c0_16] : memref<1x128xf32, #tpu.memory_space<vmem>>, vector<1x128xf32>
      tpu.vector_store %arg10[%c0_15, %c0_16], %23 {strides = array<i32>} : memref<1x128xf32, #tpu.memory_space<vmem>>, vector<1x128xf32>,
      %c0_17 = arith.constant 0 : index
      %c0_18 = arith.constant 0 : index
      %25 = vector.load %arg11[%c0_17, %c0_18] : memref<1x128xf32, #tpu.memory_space<vmem>>, vector<1x128xf32>
      %26 = arith.mulf %15, %15 : vector<64x128xf32>
      %cst_19 = arith.constant dense<0.000000e+00> : vector<128xf32>
      %27 = vector.multi_reduction <add>, %26, %cst_19 [0] : vector<64x128xf32> to vector<128xf32>
      %28 = vector.shape_cast %27 : vector<128xf32> to vector<1x128xf32>
      %29 = arith.addf %25, %28 : vector<1x128xf32>
      %c0_20 = arith.constant 0 : index
      %c0_21 = arith.constant 0 : index
      %30 = vector.load %arg11[%c0_20, %c0_21] : memref<1x128xf32, #tpu.memory_space<vmem>>, vector<1x128xf32>
      tpu.vector_store %arg11[%c0_20, %c0_21], %29 {strides = array<i32>} : memref<1x128xf32, #tpu.memory_space<vmem>>, vector<1x128xf32>,
    } else {
    }
    %c1_i32_1 = arith.constant 1 : i32
    %5 = arith.cmpi eq, %arg0, %c1_i32_1 : i32
    %6 = arith.extui %5 : i1 to i32
    %c0_i32_2 = arith.constant 0 : i32
    %7 = arith.cmpi ne, %6, %c0_i32_2 : i32
    scf.if %7 {
      %c0_i32_3 = arith.constant 0 : i32
      %8 = arith.cmpi eq, %1, %c0_i32_3 : i32
      %9 = arith.extui %8 : i1 to i32
      %c0_i32_4 = arith.constant 0 : i32
      %10 = arith.cmpi ne, %9, %c0_i32_4 : i32
      scf.if %10 {
        %c0_16 = arith.constant 0 : index
        %c0_17 = arith.constant 0 : index
        %29 = vector.load %arg10[%c0_16, %c0_17] : memref<1x128xf32, #tpu.memory_space<vmem>>, vector<1x128xf32>
        %cst_18 = arith.constant 7.812500e-03 : f32
        %30 = vector.broadcast %cst_18 : f32 to vector<1x128xf32>
        %31 = arith.mulf %29, %30 : vector<1x128xf32>
        %c0_19 = arith.constant 0 : index
        %c0_20 = arith.constant 0 : index
        %32 = vector.load %arg11[%c0_19, %c0_20] : memref<1x128xf32, #tpu.memory_space<vmem>>, vector<1x128xf32>
        %cst_21 = arith.constant 7.812500e-03 : f32
        %33 = vector.broadcast %cst_21 : f32 to vector<1x128xf32>
        %34 = arith.mulf %32, %33 : vector<1x128xf32>
        %35 = arith.mulf %31, %31 : vector<1x128xf32>
        %36 = arith.subf %34, %35 : vector<1x128xf32>
        %cst_22 = arith.constant 0.000000e+00 : f32
        %37 = vector.broadcast %cst_22 : f32 to vector<1x128xf32>
        %38 = arith.maximumf %36, %37 : vector<1x128xf32>
        %cst_23 = arith.constant 9.99999974E-6 : f32
        %39 = vector.broadcast %cst_23 : f32 to vector<1x128xf32>
        %40 = arith.addf %38, %39 : vector<1x128xf32>
        %41 = math.rsqrt %40 : vector<1x128xf32>
        %c0_24 = arith.constant 0 : index
        %c0_25 = arith.constant 0 : index
        %42 = vector.load %arg5[%c0_24, %c0_25] : memref<1x128xf32, #tpu.memory_space<vmem>>, vector<1x128xf32>
        %43 = arith.mulf %42, %41 : vector<1x128xf32>
        %c0_26 = arith.constant 0 : index
        %c0_27 = arith.constant 0 : index
        %44 = vector.load %arg12[%c0_26, %c0_27] : memref<1x128xf32, #tpu.memory_space<vmem>>, vector<1x128xf32>
        tpu.vector_store %arg12[%c0_26, %c0_27], %43 {strides = array<i32>} : memref<1x128xf32, #tpu.memory_space<vmem>>, vector<1x128xf32>,
        %c0_28 = arith.constant 0 : index
        %c0_29 = arith.constant 0 : index
        %45 = vector.load %arg6[%c0_28, %c0_29] : memref<1x128xf32, #tpu.memory_space<vmem>>, vector<1x128xf32>
        %c0_30 = arith.constant 0 : index
        %c0_31 = arith.constant 0 : index
        %46 = vector.load %arg5[%c0_30, %c0_31] : memref<1x128xf32, #tpu.memory_space<vmem>>, vector<1x128xf32>
        %47 = arith.mulf %31, %46 : vector<1x128xf32>
        %48 = arith.mulf %47, %41 : vector<1x128xf32>
        %49 = arith.subf %45, %48 : vector<1x128xf32>
        %c0_32 = arith.constant 0 : index
        %c0_33 = arith.constant 0 : index
        %50 = vector.load %arg13[%c0_32, %c0_33] : memref<1x128xf32, #tpu.memory_space<vmem>>, vector<1x128xf32>
        tpu.vector_store %arg13[%c0_32, %c0_33], %49 {strides = array<i32>} : memref<1x128xf32, #tpu.memory_space<vmem>>, vector<1x128xf32>,
      } else {
      }
      %11 = arith.index_cast %1 : i32 to index
      %c0 = arith.constant 0 : index
      %c0_5 = arith.constant 0 : index
      %12 = vector.load %arg9[%11, %c0, %c0_5] : memref<2x64x128xf32, #tpu.memory_space<vmem>>, vector<1x64x128xf32>
      %13 = vector.shape_cast %12 : vector<1x64x128xf32> to vector<64x128xf32>
      %c0_6 = arith.constant 0 : index
      %c0_7 = arith.constant 0 : index
      %14 = vector.load %arg12[%c0_6, %c0_7] : memref<1x128xf32, #tpu.memory_space<vmem>>, vector<1x128xf32>
      %15 = vector.broadcast %14 : vector<1x128xf32> to vector<64x128xf32>
      %16 = arith.mulf %13, %15 : vector<64x128xf32>
      %c0_8 = arith.constant 0 : index
      %c0_9 = arith.constant 0 : index
      %17 = vector.load %arg13[%c0_8, %c0_9] : memref<1x128xf32, #tpu.memory_space<vmem>>, vector<1x128xf32>
      %18 = vector.broadcast %17 : vector<1x128xf32> to vector<64x128xf32>
      %19 = arith.addf %16, %18 : vector<64x128xf32>
      %cst = arith.constant 0.000000e+00 : f32
      %20 = vector.broadcast %cst : f32 to vector<64x128xf32>
      %21 = arith.maximumf %19, %20 : vector<64x128xf32>
      %c0_10 = arith.constant 0 : index
      %c0_11 = arith.constant 0 : index
      %c0_12 = arith.constant 0 : index
      %22 = vector.load %arg7[%c0_10, %c0_11, %c0_12] : memref<1x64x128xbf16, #tpu.memory_space<vmem>>, vector<1x64x128xbf16>
      %23 = vector.shape_cast %22 : vector<1x64x128xbf16> to vector<64x128xbf16>
      %24 = arith.extf %23 : vector<64x128xbf16> to vector<64x128xf32>
      %25 = arith.addf %21, %24 : vector<64x128xf32>
      %c0_13 = arith.constant 0 : index
      %c0_14 = arith.constant 0 : index
      %c0_15 = arith.constant 0 : index
      %26 = vector.load %arg8[%c0_13, %c0_14, %c0_15] : memref<1x64x128xf32, #tpu.memory_space<vmem>>, vector<1x64x128xf32>
      %27 = vector.shape_cast %26 : vector<1x64x128xf32> to vector<64x128xf32>
      %28 = vector.shape_cast %25 : vector<64x128xf32> to vector<1x64x128xf32>
      tpu.vector_store %arg8[%c0_13, %c0_14, %c0_15], %28 {strides = array<i32>} : memref<1x64x128xf32, #tpu.memory_space<vmem>>, vector<1x64x128xf32>,
    } else {
    }
    return
  }
  func.func @transform_0(%arg0: i32, %arg1: i32, %arg2: i32) -> (i32, i32, i32) {
    %c1_i32 = arith.constant 1 : i32
    %0 = arith.subi %c1_i32, %arg0 : i32
    %1 = arith.muli %0, %arg1 : i32
    %c1_i32_0 = arith.constant 1 : i32
    %2 = arith.subi %c1_i32_0, %arg0 : i32
    %3 = arith.muli %2, %arg2 : i32
    %c0_i32 = arith.constant 0 : i32
    %c0_i32_1 = arith.constant 0 : i32
    return %1, %3, %c0_i32 : i32, i32, i32
  }
  func.func @transform_1(%arg0: i32, %arg1: i32, %arg2: i32) -> (i32, i32, i32) {
    %c1_i32 = arith.constant 1 : i32
    %0 = arith.subi %c1_i32, %arg0 : i32
    %1 = arith.muli %0, %arg1 : i32
    %c0_i32 = arith.constant 0 : i32
    %c0_i32_0 = arith.constant 0 : i32
    %c0_i32_1 = arith.constant 0 : i32
    return %1, %c0_i32, %c0_i32_0 : i32, i32, i32
  }
  func.func @transform_2(%arg0: i32, %arg1: i32, %arg2: i32) -> (i32, i32) {
    %c0_i32 = arith.constant 0 : i32
    %c0_i32_0 = arith.constant 0 : i32
    %c0_i32_1 = arith.constant 0 : i32
    return %c0_i32, %c0_i32_0 : i32, i32
  }
  func.func @transform_3(%arg0: i32, %arg1: i32, %arg2: i32) -> (i32, i32) {
    %c0_i32 = arith.constant 0 : i32
    %c0_i32_0 = arith.constant 0 : i32
    %c0_i32_1 = arith.constant 0 : i32
    return %c0_i32, %c0_i32_0 : i32, i32
  }
  func.func @transform_4(%arg0: i32, %arg1: i32, %arg2: i32) -> (i32, i32, i32) {
    %0 = arith.muli %arg0, %arg1 : i32
    %1 = arith.muli %arg0, %arg2 : i32
    %c0_i32 = arith.constant 0 : i32
    %c0_i32_0 = arith.constant 0 : i32
    return %0, %1, %c0_i32 : i32, i32, i32
  }
  func.func @transform_5(%arg0: i32, %arg1: i32, %arg2: i32) -> (i32, i32, i32) {
    %0 = arith.muli %arg0, %arg1 : i32
    %1 = arith.muli %arg0, %arg2 : i32
    %c0_i32 = arith.constant 0 : i32
    %c0_i32_0 = arith.constant 0 : i32
    return %0, %1, %c0_i32 : i32, i32, i32
  }
}

</mosaic_0001>

<llo_original>
// kernel: tpu_custom_call.1
$region0: #{tpu_custom_call.1}
  #allocation0 [shape = 'u32[]', space=smem, size = 0x4, offset = 0x4, fixed_abs, tag = 'smem constant byte address 0x4 - core index']
  #allocation1 [shape = 'u32[144,128]{1,0:T(1,128)}', space=vmem, size = 0x12000, scoped, tag = 'internal scratch']
  #allocation2 [shape = 'f32[2,64,128]{2,1,0:T(8,128)}', space=vmem, size = 0x10000, scoped, tag = 'scratch operand']
  #allocation3 [shape = 'f32[1,128]{1,0:T(1,128)}', space=vmem, size = 0x200, scoped, tag = 'scratch operand']
  #allocation4 [shape = 'f32[1,128]{1,0:T(1,128)}', space=vmem, size = 0x200, scoped, tag = 'scratch operand']
  #allocation5 [shape = 'f32[1,128]{1,0:T(1,128)}', space=vmem, size = 0x200, scoped, tag = 'scratch operand']
  #allocation6 [shape = 'f32[1,128]{1,0:T(1,128)}', space=vmem, size = 0x200, scoped, tag = 'scratch operand']
  %s0 = inlined_call_operand.hbm [shape: bf16[2,64,128], index: 0, kind: input, shape index: {}]
  %s1 = inlined_call_operand.hbm [shape: bf16[2,128,128], index: 1, kind: input, shape index: {}]
  %s2 = inlined_call_operand.vmem [shape: f32[1,128], index: 2, kind: input, shape index: {}]
  %s3 = inlined_call_operand.vmem [shape: f32[1,128], index: 3, kind: input, shape index: {}]
  %s4 = inlined_call_operand.hbm [shape: bf16[2,64,128], index: 4, kind: input, shape index: {}]
  %s5 = inlined_call_operand.hbm [shape: f32[2,64,128], index: 5, kind: output, shape index: {}]
  %s6 = sld [smem:[#allocation0]]
  $region81: #{tpu_custom_call.1} parent=0
    _
  %s8 = ssub.s32 1, %s6
  %s9 = scalar_select 0, %s8, %s6
  $region1: #{tpu_custom_call.1} parent=0
    #allocation7 [shape = 'u8[32768]{0}', space=vmem, size = 0x8000, scoped, tag = 'input window, operand 0']
    #allocation8 [shape = 's32[2]{0}', space=sflag, size = 0x8, scoped, tag = 'scoped memory for tpu_custom_call.1']
    #allocation9 [shape = 's32[2]{0}', space=sflag, size = 0x8, scoped, tag = 'scoped memory for tpu_custom_call.1']
    #allocation10 [shape = 'u8[65536]{0}', space=vmem, size = 0x10000, scoped, tag = 'input window, operand 1']
    #allocation11 [shape = 's32[2]{0}', space=sflag, size = 0x8, scoped, tag = 'scoped memory for tpu_custom_call.1']
    #allocation12 [shape = 'u8[32768]{0}', space=vmem, size = 0x8000, scoped, tag = 'input window, operand 4']
    #allocation13 [shape = 'u8[65536]{0}', space=vmem, size = 0x10000, scoped, tag = 'output window, operand 0']
    %10 = vsyncpa [#allocation8], 0
    %s11 = scalar_lea.sflag [#allocation8], 1
    %12 = vsyncpa %s11, 0
    %13 = vsyncpa [#allocation11], 0
    %s14 = scalar_lea.sflag [#allocation11], 1
    %15 = vsyncpa %s14, 0
    %16 = vsyncpa [#allocation9], 0
    %s17 = scalar_lea.sflag [#allocation9], 1
    %18 = vsyncpa %s17, 0
    loop: start=0, step=1, limit=6
    $region2: #{tpu_custom_call.1} parent=1 // loop_pre_header
      _
    $region3: #{tpu_custom_call.1} parent=1 // loop_header
      %s20 = sphi 0, %s24
      %p21 = scmp.ge.s32.totalorder %s20, 6
      %s27 = sphi 0, %s46
      %s28 = sphi 0, %s42
      %s29 = sphi 0, %s38
      %s30 = sphi 0, %s27
      %s31 = sphi 0, %s28
      %s32 = sphi 0, %s29
      %s33 = sphi 0, %s30
      %s34 = sphi 0, %s31
      %s35 = sphi 0, %s32
      %s57 = sphi 0, %s59
      %s60 = sphi 0, %s57
      %s61 = sphi 0, %s60
      %s77 = sphi 0, %s61
      %s87 = sphi 0, %s89
      %s90 = sphi 0, %s87
      %s91 = sphi 0, %s90
      %s107 = sphi 0, %s91
      %s111 = sphi 0, %s111
      %s113 = sphi 0, %s111
      %s114 = sphi 0, %s113
      %s128 = sphi 0, %s114
      %s132 = sphi 0, %s132
      %s134 = sphi 0, %s132
      %s135 = sphi 0, %s134
      %s149 = sphi 0, %s135
      %s161 = sphi 0, %s163
      %s164 = sphi 0, %s161
      %s165 = sphi 0, %s164
      %s181 = sphi 0, %s165
      %s193 = sphi 0, %s195
      %s196 = sphi 0, %s193
      %s197 = sphi 0, %s196
      %s213 = sphi 0, %s197
    $region4: #{tpu_custom_call.1} parent=1 // loop_header_branch
      %23 = sbr.rel (%p21) target = $region8
    $region5: #{tpu_custom_call.1} parent=1 // loop_body
      %s25 = ssub.s32 %s20, 1
      %s26 = ssub.s32 %s20, 2
      %s36 = sadd.s32 1, %s29
      %p37 = scmp.ge.s32.totalorder %s36, 1
      %s38 = scalar_select %p37, 0, %s36
      %s39 = sadd.s32 1, %s28
      %s40 = scalar_select %p37, %s39, %s28
      %p41 = scmp.ge.s32.totalorder %s40, 2
      %s42 = scalar_select %p41, 0, %s40
      %s43 = sadd.s32 1, %s27
      %s44 = scalar_select %p41, %s43, %s27
      %p45 = scmp.ge.s32.totalorder %s44, 2
      %s46 = scalar_select %p45, 0, %s44
      %s47 = ssub.s32 1, %s27
      %s48 = smul.u32 %s47, %s28
      %s49 = smul.u32 %s47, %s29
      %s50 = ssub.s32 1, %s46
      %s51 = smul.u32 %s50, %s42
      %s52 = smul.u32 %s50, %s38
      %s53 = ssub.s32 %s48, %s51
      %s54 = ssub.s32 %s49, %s52
      %s55 = sor.u32 %s53, %s54
      %p56 = scmp.eq.s32.totalorder %s55, 0
      %s58 = sadd.s32 %s57, 1
      %s59 = scalar_select %p56, %s57, %s58
      %p62 = pneg %p56
      %p63 = scmp.eq.s32.totalorder %s20, 3
      %p64 = por %p62, %p63
      %p65 = scmp.ne.s32.totalorder %s57, %s60
      %p66 = scmp.eq.s32.totalorder %s20, 0
      %p67 = por %p65, %p66
      %p68 = scmp.ne.s32.totalorder %s57, %s60
      %p69 = scmp.eq.s32.totalorder %s25, 3
      %p70 = por %p68, %p69
      %p71 = scmp.ne.s32.totalorder %s60, %s61
      %p72 = scmp.eq.s32.totalorder %s25, 0
      %p73 = por %p71, %p72
      %p74 = scmp.ne.s32.totalorder %s60, %s61
      %p75 = scmp.eq.s32.totalorder %s26, 3
      %p76 = por %p74, %p75
      %p78 = scmp.ne.s32.totalorder %s61, %s77
      %p79 = scmp.eq.s32.totalorder %s26, 0
      %p80 = por %p78, %p79
      %s81 = ssub.s32 1, %s27
      %s82 = smul.u32 %s81, %s28
      %s83 = ssub.s32 1, %s46
      %s84 = smul.u32 %s83, %s42
      %s85 = ssub.s32 %s82, %s84
      %p86 = scmp.eq.s32.totalorder %s85, 0
      %s88 = sadd.s32 %s87, 1
      %s89 = scalar_select %p86, %s87, %s88
      %p92 = pneg %p86
      %p93 = scmp.eq.s32.totalorder %s20, 3
      %p94 = por %p92, %p93
      %p95 = scmp.ne.s32.totalorder %s87, %s90
      %p96 = scmp.eq.s32.totalorder %s20, 0
      %p97 = por %p95, %p96
      %p98 = scmp.ne.s32.totalorder %s87, %s90
      %p99 = scmp.eq.s32.totalorder %s25, 3
      %p100 = por %p98, %p99
      %p101 = scmp.ne.s32.totalorder %s90, %s91
      %p102 = scmp.eq.s32.totalorder %s25, 0
      %p103 = por %p101, %p102
      %p104 = scmp.ne.s32.totalorder %s90, %s91
      %p105 = scmp.eq.s32.totalorder %s26, 3
      %p106 = por %p104, %p105
      %p108 = scmp.ne.s32.totalorder %s91, %s107
      %p109 = scmp.eq.s32.totalorder %s26, 0
      %p110 = por %p108, %p109
      %s112 = sadd.s32 %s111, 1
      %p115 = scmp.eq.s32.totalorder %s20, 3
      %p116 = scmp.ne.s32.totalorder %s111, %s113
      %p117 = scmp.eq.s32.totalorder %s20, 0
      %p118 = por %p116, %p117
      %p119 = scmp.ne.s32.totalorder %s111, %s113
      %p120 = scmp.eq.s32.totalorder %s25, 3
      %p121 = por %p119, %p120
      %p122 = scmp.ne.s32.totalorder %s113, %s114
      %p123 = scmp.eq.s32.totalorder %s25, 0
      %p124 = por %p122, %p123
      %p125 = scmp.ne.s32.totalorder %s113, %s114
      %p126 = scmp.eq.s32.totalorder %s26, 3
      %p127 = por %p125, %p126
      %p129 = scmp.ne.s32.totalorder %s114, %s128
      %p130 = scmp.eq.s32.totalorder %s26, 0
      %p131 = por %p129, %p130
      %s133 = sadd.s32 %s132, 1
      %p136 = scmp.eq.s32.totalorder %s20, 3
      %p137 = scmp.ne.s32.totalorder %s132, %s134
      %p138 = scmp.eq.s32.totalorder %s20, 0
      %p139 = por %p137, %p138
      %p140 = scmp.ne.s32.totalorder %s132, %s134
      %p141 = scmp.eq.s32.totalorder %s25, 3
      %p142 = por %p140, %p141
      %p143 = scmp.ne.s32.totalorder %s134, %s135
      %p144 = scmp.eq.s32.totalorder %s25, 0
      %p145 = por %p143, %p144
      %p146 = scmp.ne.s32.totalorder %s134, %s135
      %p147 = scmp.eq.s32.totalorder %s26, 3
      %p148 = por %p146, %p147
      %p150 = scmp.ne.s32.totalorder %s135, %s149
      %p151 = scmp.eq.s32.totalorder %s26, 0
      %p152 = por %p150, %p151
      %s153 = smul.u32 %s27, %s28
      %s154 = smul.u32 %s27, %s29
      %s155 = smul.u32 %s46, %s42
      %s156 = smul.u32 %s46, %s38
      %s157 = ssub.s32 %s153, %s155
      %s158 = ssub.s32 %s154, %s156
      %s159 = sor.u32 %s157, %s158
      %p160 = scmp.eq.s32.totalorder %s159, 0
      %s162 = sadd.s32 %s161, 1
      %s163 = scalar_select %p160, %s161, %s162
      %p166 = pneg %p160
      %p167 = scmp.eq.s32.totalorder %s20, 3
      %p168 = por %p166, %p167
      %p169 = scmp.ne.s32.totalorder %s161, %s164
      %p170 = scmp.eq.s32.totalorder %s20, 0
      %p171 = por %p169, %p170
      %p172 = scmp.ne.s32.totalorder %s161, %s164
      %p173 = scmp.eq.s32.totalorder %s25, 3
      %p174 = por %p172, %p173
      %p175 = scmp.ne.s32.totalorder %s164, %s165
      %p176 = scmp.eq.s32.totalorder %s25, 0
      %p177 = por %p175, %p176
      %p178 = scmp.ne.s32.totalorder %s164, %s165
      %p179 = scmp.eq.s32.totalorder %s26, 3
      %p180 = por %p178, %p179
      %p182 = scmp.ne.s32.totalorder %s165, %s181
      %p183 = scmp.eq.s32.totalorder %s26, 0
      %p184 = por %p182, %p183
      %s185 = smul.u32 %s27, %s28
      %s186 = smul.u32 %s27, %s29
      %s187 = smul.u32 %s46, %s42
      %s188 = smul.u32 %s46, %s38
      %s189 = ssub.s32 %s185, %s187
      %s190 = ssub.s32 %s186, %s188
      %s191 = sor.u32 %s189, %s190
      %p192 = scmp.eq.s32.totalorder %s191, 0
      %s194 = sadd.s32 %s193, 1
      %s195 = scalar_select %p192, %s193, %s194
      %p198 = pneg %p192
      %p199 = scmp.eq.s32.totalorder %s20, 3
      %p200 = por %p198, %p199
      %p201 = scmp.ne.s32.totalorder %s193, %s196
      %p202 = scmp.eq.s32.totalorder %s20, 0
      %p203 = por %p201, %p202
      %p204 = scmp.ne.s32.totalorder %s193, %s196
      %p205 = scmp.eq.s32.totalorder %s25, 3
      %p206 = por %p204, %p205
      %p207 = scmp.ne.s32.totalorder %s196, %s197
      %p208 = scmp.eq.s32.totalorder %s25, 0
      %p209 = por %p207, %p208
      %p210 = scmp.ne.s32.totalorder %s196, %s197
      %p211 = scmp.eq.s32.totalorder %s26, 3
      %p212 = por %p210, %p211
      %p214 = scmp.ne.s32.totalorder %s197, %s213
      %p215 = scmp.eq.s32.totalorder %s26, 0
      %p216 = por %p214, %p215
      %p217 = scmp.le.s32.totalorder 1, %s20
      %p218 = scmp.lt.s32.totalorder %s20, 5
      %p219 = pnand %p217, %p218
      %p220 = pneg %p219
      // Predicated region
      $region9: #{tpu_custom_call.1} parent=5 // pred_check
        _
      $region10: #{tpu_custom_call.1} parent=5 // pred_check_branch
        %222 = sbr.rel (%p219) target = $region12
      $region11: #{tpu_custom_call.1} parent=5 // pred_region
        %s223 = ssub.s32 %s20, 1
        // Predicated region
        $region13: #{tpu_custom_call.1} parent=11 // pred_check
          %p224 = pneg %p124
        $region14: #{tpu_custom_call.1} parent=11 // pred_check_branch
          %226 = sbr.rel (%p224) target = $region16
        $region15: #{tpu_custom_call.1} parent=11 // pred_region
          _
        $region16: #{tpu_custom_call.1} parent=11 // pred_fallthru
          _
        // Predicated region
        $region17: #{tpu_custom_call.1} parent=11 // pred_check
          %p227 = pneg %p145
        $region18: #{tpu_custom_call.1} parent=11 // pred_check_branch
          %229 = sbr.rel (%p227) target = $region20
        $region19: #{tpu_custom_call.1} parent=11 // pred_region
          _
        $region20: #{tpu_custom_call.1} parent=11 // pred_fallthru
          _
      $region12: #{tpu_custom_call.1} parent=5 // pred_fallthru
        _
      %p230 = scmp.lt.s32.totalorder %s20, 4
      // Predicated region
      $region21: #{tpu_custom_call.1} parent=5 // pred_check
        %p231 = pneg %p230
      $region22: #{tpu_custom_call.1} parent=5 // pred_check_branch
        %233 = sbr.rel (%p231) target = $region24
      $region23: #{tpu_custom_call.1} parent=5 // pred_region
        // Predicated region
        $region25: #{tpu_custom_call.1} parent=23 // pred_check
          %p234 = pneg %p67
        $region26: #{tpu_custom_call.1} parent=23 // pred_check_branch
          %236 = sbr.rel (%p234) target = $region28
        $region27: #{tpu_custom_call.1} parent=23 // pred_region
          %s237 = sand.u32 %s57, 1
          %s238 = scalar_lea.sflag [#allocation8], %s237
          %s239 = sand.u32 %s57, 1
          %s240 = smul.addr %s239, 32
          %s241 = scalar_lea.vmem [#allocation7], %s240
          %s242 = ssub.s32 1, %s27
          %s243 = smul.u32 %s242, %s28
          %s244 = smul.u32 %s242, %s29
          %s245 = smul.u32 8, %s244
          %s247 = ssub.s32 512, 512
          %248 = vsyncadd %s238, %s247
          %s249 = smul.addr %s243, 8
          %s250 = sadd.s32 %s245, %s249
          %s251 = smul.addr %s250, 64
          %s252 = scalar_lea.hbm %s0, %s251
          %s253 = sshll.u32 %s241, 4
          %s254 = int_to_ptr.vmem [resolvable:$true] %s253
          %259 = dma.hbm_to_vmem [thread:$0]  %s252, 512, %s254, %s238, 64, 64, 4
        $region28: #{tpu_custom_call.1} parent=23 // pred_fallthru
          _
        // Predicated region
        $region29: #{tpu_custom_call.1} parent=23 // pred_check
          %p260 = pneg %p97
        $region30: #{tpu_custom_call.1} parent=23 // pred_check_branch
          %262 = sbr.rel (%p260) target = $region32
        $region31: #{tpu_custom_call.1} parent=23 // pred_region
          %s263 = sand.u32 %s20, 1
          %s264 = scalar_lea.sflag [#allocation11], %s263
          %s265 = sand.u32 %s87, 1
          %s266 = smul.addr %s265, 64
          %s267 = scalar_lea.vmem [#allocation10], %s266
          %s268 = ssub.s32 1, %s27
          %s269 = smul.u32 %s268, %s28
          %s271 = ssub.s32 1024, 1024
          %272 = vsyncadd %s264, %s271
          %s273 = smul.addr %s269, 16
          %s274 = smul.addr %s273, 64
          %s275 = scalar_lea.hbm %s1, %s274
          %s276 = sshll.u32 %s267, 4
          %s277 = int_to_ptr.vmem [resolvable:$true] %s276
          %282 = dma.hbm_to_vmem [thread:$0]  %s275, 1024, %s277, %s264, 64, 64, 4
        $region32: #{tpu_custom_call.1} parent=23 // pred_fallthru
          _
        // Predicated region
        $region33: #{tpu_custom_call.1} parent=23 // pred_check
          %p283 = pneg %p171
        $region34: #{tpu_custom_call.1} parent=23 // pred_check_branch
          %285 = sbr.rel (%p283) target = $region36
        $region35: #{tpu_custom_call.1} parent=23 // pred_region
          %s286 = sand.u32 %s20, 1
          %s287 = scalar_lea.sflag [#allocation11], %s286
          %s288 = sand.u32 %s161, 1
          %s289 = smul.addr %s288, 32
          %s290 = scalar_lea.vmem [#allocation12], %s289
          %s291 = smul.u32 %s27, %s28
          %s292 = smul.u32 %s27, %s29
          %s293 = smul.u32 8, %s292
          %s295 = ssub.s32 512, 512
          %296 = vsyncadd %s287, %s295
          %s297 = smul.addr %s291, 8
          %s298 = sadd.s32 %s293, %s297
          %s299 = smul.addr %s298, 64
          %s300 = scalar_lea.hbm %s4, %s299
          %s301 = sshll.u32 %s290, 4
          %s302 = int_to_ptr.vmem [resolvable:$true] %s301
          %307 = dma.hbm_to_vmem [thread:$0]  %s300, 512, %s302, %s287, 64, 64, 4
        $region36: #{tpu_custom_call.1} parent=23 // pred_fallthru
          _
      $region24: #{tpu_custom_call.1} parent=5 // pred_fallthru
        _
      %p308 = scmp.le.s32.totalorder 1, %s20
      %p309 = scmp.lt.s32.totalorder %s20, 5
      %p310 = pnand %p308, %p309
      %p311 = pneg %p310
      // Predicated region
      $region37: #{tpu_custom_call.1} parent=5 // pred_check
        _
      $region38: #{tpu_custom_call.1} parent=5 // pred_check_branch
        %313 = sbr.rel (%p310) target = $region40
      $region39: #{tpu_custom_call.1} parent=5 // pred_region
        %s314 = ssub.s32 %s20, 1
        %s315 = sand.u32 %s60, 1
        %s316 = scalar_lea.sflag [#allocation8], %s315
        %s317 = sand.u32 %s60, 1
        %s318 = smul.addr %s317, 32
        %s319 = scalar_lea.vmem [#allocation7], %s318
        // Predicated region
        $region41: #{tpu_custom_call.1} parent=39 // pred_check
          %p320 = pneg %p73
        $region42: #{tpu_custom_call.1} parent=39 // pred_check_branch
          %322 = sbr.rel (%p320) target = $region44
        $region43: #{tpu_custom_call.1} parent=39 // pred_region
          %323 = dma.done %s316, 512
        $region44: #{tpu_custom_call.1} parent=39 // pred_fallthru
          _
        %s324 = sand.u32 %s25, 1
        %s325 = scalar_lea.sflag [#allocation11], %s324
        %s326 = sand.u32 %s90, 1
        %s327 = smul.addr %s326, 64
        %s328 = scalar_lea.vmem [#allocation10], %s327
        // Predicated region
        $region45: #{tpu_custom_call.1} parent=39 // pred_check
          %p329 = pneg %p103
        $region46: #{tpu_custom_call.1} parent=39 // pred_check_branch
          %331 = sbr.rel (%p329) target = $region48
        $region47: #{tpu_custom_call.1} parent=39 // pred_region
          %332 = dma.done %s325, 1024
        $region48: #{tpu_custom_call.1} parent=39 // pred_fallthru
          _
        %s333 = sand.u32 %s25, 1
        %s334 = scalar_lea.sflag [#allocation11], %s333
        %s335 = sand.u32 %s164, 1
        %s336 = smul.addr %s335, 32
        %s337 = scalar_lea.vmem [#allocation12], %s336
        // Predicated region
        $region49: #{tpu_custom_call.1} parent=39 // pred_check
          %p338 = pneg %p177
        $region50: #{tpu_custom_call.1} parent=39 // pred_check_branch
          %340 = sbr.rel (%p338) target = $region52
        $region51: #{tpu_custom_call.1} parent=39 // pred_region
          %341 = dma.done %s334, 512
        $region52: #{tpu_custom_call.1} parent=39 // pred_fallthru
          _
        %s342 = sand.u32 %s60, 1
        %s343 = scalar_lea.sflag [#allocation8], %s342
        %s344 = sand.u32 %s60, 1
        %s345 = smul.addr %s344, 32
        %s346 = scalar_lea.vmem [#allocation7], %s345
        %p347 = pneg %p73
        %p348 = pneg %p70
        %s349 = sand.u32 %s25, 1
        %s350 = scalar_lea.sflag [#allocation11], %s349
        %s351 = sand.u32 %s90, 1
        %s352 = smul.addr %s351, 64
        %s353 = scalar_lea.vmem [#allocation10], %s352
        %p354 = pneg %p103
        %p355 = pneg %p100
        %p356 = pneg %p124
        %p357 = pneg %p121
        %p358 = pneg %p145
        %p359 = pneg %p142
        %s360 = sand.u32 %s25, 1
        %s361 = scalar_lea.sflag [#allocation11], %s360
        %s362 = sand.u32 %s164, 1
        %s363 = smul.addr %s362, 32
        %s364 = scalar_lea.vmem [#allocation12], %s363
        %p365 = pneg %p177
        %p366 = pneg %p174
        %p367 = pneg %p209
        %p368 = pneg %p206
        %s369 = sand.u32 %s196, 1
        %s370 = scalar_lea.sflag [#allocation9], %s369
        %s371 = sand.u32 %s196, 1
        %s372 = smul.addr %s371, 64
        %s373 = scalar_lea.vmem [#allocation13], %s372
        %s374 = ssub.s32 1, %s30
        %s375 = smul.u32 %s374, %s31
        %s376 = smul.u32 %s374, %s32
        %s377 = smul.u32 8, %s376
        %s378 = ssub.s32 1, %s30
        %s379 = smul.u32 %s378, %s31
        %s380 = smul.u32 %s30, %s31
        %s381 = smul.u32 %s30, %s32
        %s382 = smul.u32 8, %s381
        %s383 = smul.u32 %s30, %s31
        %s384 = smul.u32 %s30, %s32
        %s385 = smul.u32 8, %s384
        %s387 = sadd.s32 %s31, %s32
        %p388 = scmp.eq.s32.totalorder %s30, 0
        // Predicated region
        $region53: #{tpu_custom_call.1} parent=39 // pred_check
          %p389 = pneg %p388
        $region54: #{tpu_custom_call.1} parent=39 // pred_check_branch
          %391 = sbr.rel (%p389) target = $region56
        $region55: #{tpu_custom_call.1} parent=39 // pred_region
          %p392 = scmp.eq.s32.totalorder %s387, 0
          // Predicated region
          $region57: #{tpu_custom_call.1} parent=55 // pred_check
            %p393 = pneg %p392
          $region58: #{tpu_custom_call.1} parent=55 // pred_check_branch
            %395 = sbr.rel (%p393) target = $region60
          $region59: #{tpu_custom_call.1} parent=55 // pred_region
            %396 = vst [vmem:[#allocation3] sm:$0x1] 0.0
            %397 = vst [vmem:[#allocation4] sm:$0x1] 0.0
          $region60: #{tpu_custom_call.1} parent=55 // pred_fallthru
            _
          %v398 = vld [vmem:[%s319] sm:$0xf]
          %v399 = vld [vmem:[%s319 + $0x4] sm:$0xf]
          %v400 = vld [vmem:[%s319 + $0x8] sm:$0xf]
          %v401 = vld [vmem:[%s319 + $0xc] sm:$0xf]
          %v402 = vld [vmem:[%s319 + $0x10] sm:$0xf]
          %v403 = vld [vmem:[%s319 + $0x14] sm:$0xf]
          %v404 = vld [vmem:[%s319 + $0x18] sm:$0xf]
          %v405 = vld [vmem:[%s319 + $0x1c] sm:$0xf]
          %v406 = vld [vmem:[%s328] sm:$0xf]
          %v407 = vld [vmem:[%s328 + $0x4] sm:$0xf]
          %v408 = vld [vmem:[%s328 + $0x8] sm:$0xf]
          %v409 = vld [vmem:[%s328 + $0xc] sm:$0xf]
          %v410 = vld [vmem:[%s328 + $0x10] sm:$0xf]
          %v411 = vld [vmem:[%s328 + $0x14] sm:$0xf]
          %v412 = vld [vmem:[%s328 + $0x18] sm:$0xf]
          %v413 = vld [vmem:[%s328 + $0x1c] sm:$0xf]
          %v414 = vld [vmem:[%s328 + $0x20] sm:$0xf]
          %v415 = vld [vmem:[%s328 + $0x24] sm:$0xf]
          %v416 = vld [vmem:[%s328 + $0x28] sm:$0xf]
          %v417 = vld [vmem:[%s328 + $0x2c] sm:$0xf]
          %v418 = vld [vmem:[%s328 + $0x30] sm:$0xf]
          %v419 = vld [vmem:[%s328 + $0x34] sm:$0xf]
          %v420 = vld [vmem:[%s328 + $0x38] sm:$0xf]
          %v421 = vld [vmem:[%s328 + $0x3c] sm:$0xf]
          %v430 = vunpack.c.l.b16 %v398
          %v431 = vunpack.c.l.b16 %v399
          %v432 = vunpack.c.l.b16 %v400
          %v433 = vunpack.c.l.b16 %v401
          %v434 = vunpack.c.l.b16 %v402
          %v435 = vunpack.c.l.b16 %v403
          %v436 = vunpack.c.l.b16 %v404
          %v437 = vunpack.c.l.b16 %v405
          %v438 = vpack.c.b16 %v431, %v430
          %v439 = vpack.c.b16 %v433, %v432
          %v440 = vpack.c.b16 %v435, %v434
          %v441 = vpack.c.b16 %v437, %v436
          %v462 = vunpack.c.l.b16 %v406
          %v463 = vunpack.c.l.b16 %v407
          %v464 = vunpack.c.l.b16 %v408
          %v465 = vunpack.c.l.b16 %v409
          %v466 = vunpack.c.l.b16 %v410
          %v467 = vunpack.c.l.b16 %v411
          %v468 = vunpack.c.l.b16 %v412
          %v469 = vunpack.c.l.b16 %v413
          %v470 = vunpack.c.l.b16 %v414
          %v471 = vunpack.c.l.b16 %v415
          %v472 = vunpack.c.l.b16 %v416
          %v473 = vunpack.c.l.b16 %v417
          %v474 = vunpack.c.l.b16 %v418
          %v475 = vunpack.c.l.b16 %v419
          %v476 = vunpack.c.l.b16 %v420
          %v477 = vunpack.c.l.b16 %v421
          %v478 = vpack.c.b16 %v463, %v462
          %v479 = vpack.c.b16 %v465, %v464
          %v480 = vpack.c.b16 %v467, %v466
          %v481 = vpack.c.b16 %v469, %v468
          %v482 = vpack.c.b16 %v471, %v470
          %v483 = vpack.c.b16 %v473, %v472
          %v484 = vpack.c.b16 %v475, %v474
          %v485 = vpack.c.b16 %v477, %v476
          %494 = vmatprep.subr.bf16.mxu0 0
          %495 = vmatpush1.bf16.msra.mxu0 %v478
          %496 = vmatprep.subr.bf16.mxu0 0
          %497 = vmatpush1.bf16.msra.mxu0 %v479
          %498 = vmatprep.subr.bf16.mxu0 0
          %499 = vmatpush1.bf16.msra.mxu0 %v480
          %500 = vmatprep.subr.bf16.mxu0 0
          %501 = vmatpush1.bf16.msra.mxu0 %v481
          %502 = vmatprep.subr.bf16.mxu0 0
          %503 = vmatpush1.bf16.msra.mxu0 %v482
          %504 = vmatprep.subr.bf16.mxu0 0
          %505 = vmatpush1.bf16.msra.mxu0 %v483
          %506 = vmatprep.subr.bf16.mxu0 0
          %507 = vmatpush1.bf16.msra.mxu0 %v484
          %508 = vmatprep.subr.bf16.mxu0 0
          %509 = vmatpush1.bf16.msra.mxu0 %v485
          %510 = vmatprep.subr.bf16.mxu0 0
          %511 = vmatpush1.bf16.msra.mxu0 0
          %512 = vmatprep.subr.bf16.mxu0 0
          %513 = vmatpush1.bf16.msra.mxu0 0
          %514 = vmatprep.subr.bf16.mxu0 0
          %515 = vmatpush1.bf16.msra.mxu0 0
          %516 = vmatprep.subr.bf16.mxu0 0
          %517 = vmatpush1.bf16.msra.mxu0 0
          %518 = vmatprep.subr.bf16.mxu0 0
          %519 = vmatpush1.bf16.msra.mxu0 0
          %520 = vmatprep.subr.bf16.mxu0 0
          %521 = vmatpush1.bf16.msra.mxu0 0
          %522 = vmatprep.subr.bf16.mxu0 0
          %523 = vmatpush1.bf16.msra.mxu0 0
          %524 = vmatprep.subr.bf16.mxu0 0
          %525 = vmatpush1.bf16.msra.mxu0 0
          %526 = vmatprep.mubr.bf16.mxu0 0
          %527 = vmatmul.mubr.bf16.gmra.mrb[0].mxu0 %v438
          %v528 = vpop.f32.mrb[0].mxu0
          %v529 = vadd.f32 0.0, %v528
          %v530 = vpop.f32.mrb[0].mxu0
          %v531 = vpop.f32.mrb[0].mxu0
          %v532 = vadd.f32 0.0, %v531
          %v533 = vpop.f32.mrb[0].mxu0
          %534 = vmatprep.mubr.bf16.mxu0 0
          %535 = vmatmul.mubr.bf16.gmra.mrb[0].mxu0 %v439
          %v536 = vpop.f32.mrb[0].mxu0
          %v537 = vadd.f32 0.0, %v536
          %v538 = vpop.f32.mrb[0].mxu0
          %v539 = vpop.f32.mrb[0].mxu0
          %v540 = vadd.f32 0.0, %v539
          %v541 = vpop.f32.mrb[0].mxu0
          %542 = vmatprep.mubr.bf16.mxu0 0
          %543 = vmatmul.mubr.bf16.gmra.mrb[0].mxu0 %v440
          %v544 = vpop.f32.mrb[0].mxu0
          %v545 = vadd.f32 0.0, %v544
          %v546 = vpop.f32.mrb[0].mxu0
          %v547 = vpop.f32.mrb[0].mxu0
          %v548 = vadd.f32 0.0, %v547
          %v549 = vpop.f32.mrb[0].mxu0
          %550 = vmatprep.mubr.bf16.mxu0 0
          %551 = vmatmul.mubr.bf16.gmra.mrb[0].mxu0 %v441
          %v552 = vpop.f32.mrb[0].mxu0
          %v553 = vadd.f32 0.0, %v552
          %v554 = vpop.f32.mrb[0].mxu0
          %v555 = vpop.f32.mrb[0].mxu0
          %v556 = vadd.f32 0.0, %v555
          %v557 = vpop.f32.mrb[0].mxu0
          %558 = vdwg.mxu0
          %s559 = smul.u32 %s387, 64
          %s560 = scalar_lea.vmem [#allocation2], %s559
          %561 = vst [vmem:[%s560] sm:$0xff] %v529
          %562 = vst [vmem:[%s560 + $0x8] sm:$0xff] %v532
          %563 = vst [vmem:[%s560 + $0x10] sm:$0xff] %v537
          %564 = vst [vmem:[%s560 + $0x18] sm:$0xff] %v540
          %565 = vst [vmem:[%s560 + $0x20] sm:$0xff] %v545
          %566 = vst [vmem:[%s560 + $0x28] sm:$0xff] %v548
          %567 = vst [vmem:[%s560 + $0x30] sm:$0xff] %v553
          %568 = vst [vmem:[%s560 + $0x38] sm:$0xff] %v556
          %v569 = vld [vmem:[#allocation3] sm:$0x1]
          %v570 = vadd.f32 %v529, %v532
          %v571 = vadd.f32 %v570, %v537
          %v572 = vadd.f32 %v571, %v540
          %v573 = vadd.f32 %v572, %v545
          %v574 = vadd.f32 %v573, %v548
          %v575 = vadd.f32 %v574, %v553
          %v576 = vadd.f32 %v575, %v556
          %v577 = vrot.slane %v576, 4
          %v578 = vadd.f32 %v576, %v577
          %v579 = vrot.slane %v578, 2
          %v580 = vadd.f32 %v578, %v579
          %v581 = vrot.slane %v580, 1
          %v582 = vadd.f32 %v580, %v581
          %v583 = vadd.f32 %v569, %v582
          %584 = vst [vmem:[#allocation3] sm:$0x1] %v583
          %v585 = vld [vmem:[#allocation4] sm:$0x1]
          %v586 = vmul.f32 %v529, %v529
          %v587 = vmul.f32 %v532, %v532
          %v588 = vmul.f32 %v537, %v537
          %v589 = vmul.f32 %v540, %v540
          %v590 = vmul.f32 %v545, %v545
          %v591 = vmul.f32 %v548, %v548
          %v592 = vmul.f32 %v553, %v553
          %v593 = vmul.f32 %v556, %v556
          %v594 = vadd.f32 %v586, %v587
          %v595 = vadd.f32 %v594, %v588
          %v596 = vadd.f32 %v595, %v589
          %v597 = vadd.f32 %v596, %v590
          %v598 = vadd.f32 %v597, %v591
          %v599 = vadd.f32 %v598, %v592
          %v600 = vadd.f32 %v599, %v593
          %v601 = vrot.slane %v600, 4
          %v602 = vadd.f32 %v600, %v601
          %v603 = vrot.slane %v602, 2
          %v604 = vadd.f32 %v602, %v603
          %v605 = vrot.slane %v604, 1
          %v606 = vadd.f32 %v604, %v605
          %v607 = vadd.f32 %v585, %v606
          %608 = vst [vmem:[#allocation4] sm:$0x1] %v607
        $region56: #{tpu_custom_call.1} parent=39 // pred_fallthru
          _
        %p609 = scmp.eq.s32.totalorder %s30, 1
        // Predicated region
        $region61: #{tpu_custom_call.1} parent=39 // pred_check
          %p610 = pneg %p609
        $region62: #{tpu_custom_call.1} parent=39 // pred_check_branch
          %612 = sbr.rel (%p610) target = $region64
        $region63: #{tpu_custom_call.1} parent=39 // pred_region
          %p613 = scmp.eq.s32.totalorder %s387, 0
          // Predicated region
          $region65: #{tpu_custom_call.1} parent=63 // pred_check
            %p614 = pneg %p613
          $region66: #{tpu_custom_call.1} parent=63 // pred_check_branch
            %616 = sbr.rel (%p614) target = $region68
          $region67: #{tpu_custom_call.1} parent=63 // pred_region
            %v617 = vld [vmem:[#allocation3] sm:$0x1]
            %v618 = vmul.f32 %v617, 0.0078125
            %v619 = vld [vmem:[#allocation4] sm:$0x1]
            %v620 = vmul.f32 %v619, 0.0078125
            %v621 = vmul.f32 %v618, %v618
            %v622 = vsub.f32 %v620, %v621
            %v623 = vmax.f32 %v622, 0.0
            %v624 = vadd.f32 %v623, 1e-05
            %v625 = vrsqrt.pop %v624
            %v626 = vld [vmem:[%s2] sm:$0x1]
            %v627 = vmul.f32 %v626, %v625
            %628 = vst [vmem:[#allocation5] sm:$0x1] %v627
            %v629 = vld [vmem:[%s3] sm:$0x1]
            %v630 = vld [vmem:[%s2] sm:$0x1]
            %v631 = vmul.f32 %v618, %v630
            %v632 = vmul.f32 %v631, %v625
            %v633 = vsub.f32 %v629, %v632
            %634 = vst [vmem:[#allocation6] sm:$0x1] %v633
          $region68: #{tpu_custom_call.1} parent=63 // pred_fallthru
            _
          %s635 = smul.u32 %s387, 64
          %s636 = scalar_lea.vmem [#allocation2], %s635
          %v637 = vld [vmem:[%s636] sm:$0xff]
          %v638 = vld [vmem:[%s636 + $0x8] sm:$0xff]
          %v639 = vld [vmem:[%s636 + $0x10] sm:$0xff]
          %v640 = vld [vmem:[%s636 + $0x18] sm:$0xff]
          %v641 = vld [vmem:[%s636 + $0x20] sm:$0xff]
          %v642 = vld [vmem:[%s636 + $0x28] sm:$0xff]
          %v643 = vld [vmem:[%s636 + $0x30] sm:$0xff]
          %v644 = vld [vmem:[%s636 + $0x38] sm:$0xff]
          %v645 = vld [vmem:[#allocation5] sm:$0x1]
          %v647 = vlaneseq
          %v648 = vshrl.u32 %v647, 7
          %v649 = vsub.s32 0, %v648
          %v650 = vrot.slane %v645, %v649
          %v652 = vmul.f32 %v637, %v650
          %v653 = vmul.f32 %v638, %v650
          %v654 = vmul.f32 %v639, %v650
          %v655 = vmul.f32 %v640, %v650
          %v656 = vmul.f32 %v641, %v650
          %v657 = vmul.f32 %v642, %v650
          %v658 = vmul.f32 %v643, %v650
          %v659 = vmul.f32 %v644, %v650
          %v660 = vld [vmem:[#allocation6] sm:$0x1]
          %v662 = vlaneseq
          %v663 = vshrl.u32 %v662, 7
          %v664 = vsub.s32 0, %v663
          %v665 = vrot.slane %v660, %v664
          %v667 = vadd.f32 %v652, %v665
          %v668 = vadd.f32 %v653, %v665
          %v669 = vadd.f32 %v654, %v665
          %v670 = vadd.f32 %v655, %v665
          %v671 = vadd.f32 %v656, %v665
          %v672 = vadd.f32 %v657, %v665
          %v673 = vadd.f32 %v658, %v665
          %v674 = vadd.f32 %v659, %v665
          %v675 = vmax.f32 %v667, 0.0
          %v676 = vmax.f32 %v668, 0.0
          %v677 = vmax.f32 %v669, 0.0
          %v678 = vmax.f32 %v670, 0.0
          %v679 = vmax.f32 %v671, 0.0
          %v680 = vmax.f32 %v672, 0.0
          %v681 = vmax.f32 %v673, 0.0
          %v682 = vmax.f32 %v674, 0.0
          %v683 = vld [vmem:[%s337] sm:$0xf]
          %v684 = vld [vmem:[%s337 + $0x4] sm:$0xf]
          %v685 = vld [vmem:[%s337 + $0x8] sm:$0xf]
          %v686 = vld [vmem:[%s337 + $0xc] sm:$0xf]
          %v687 = vld [vmem:[%s337 + $0x10] sm:$0xf]
          %v688 = vld [vmem:[%s337 + $0x14] sm:$0xf]
          %v689 = vld [vmem:[%s337 + $0x18] sm:$0xf]
          %v690 = vld [vmem:[%s337 + $0x1c] sm:$0xf]
          %v691 = vunpack.c.l.bf16 %v683
          %v692 = vunpack.c.l.bf16 %v684
          %v693 = vunpack.c.l.bf16 %v685
          %v694 = vunpack.c.l.bf16 %v686
          %v695 = vunpack.c.l.bf16 %v687
          %v696 = vunpack.c.l.bf16 %v688
          %v697 = vunpack.c.l.bf16 %v689
          %v698 = vunpack.c.l.bf16 %v690
          %v699 = vadd.f32 %v675, %v691
          %v700 = vadd.f32 %v676, %v692
          %v701 = vadd.f32 %v677, %v693
          %v702 = vadd.f32 %v678, %v694
          %v703 = vadd.f32 %v679, %v695
          %v704 = vadd.f32 %v680, %v696
          %v705 = vadd.f32 %v681, %v697
          %v706 = vadd.f32 %v682, %v698
          %707 = vst [vmem:[%s373] sm:$0xff] %v699
          %708 = vst [vmem:[%s373 + $0x8] sm:$0xff] %v700
          %709 = vst [vmem:[%s373 + $0x10] sm:$0xff] %v701
          %710 = vst [vmem:[%s373 + $0x18] sm:$0xff] %v702
          %711 = vst [vmem:[%s373 + $0x20] sm:$0xff] %v703
          %712 = vst [vmem:[%s373 + $0x28] sm:$0xff] %v704
          %713 = vst [vmem:[%s373 + $0x30] sm:$0xff] %v705
          %714 = vst [vmem:[%s373 + $0x38] sm:$0xff] %v706
        $region64: #{tpu_custom_call.1} parent=39 // pred_fallthru
          _
        %s715 = sand.u32 %s196, 1
        %s716 = scalar_lea.sflag [#allocation9], %s715
        %s717 = sand.u32 %s196, 1
        %s718 = smul.addr %s717, 64
        %s719 = scalar_lea.vmem [#allocation13], %s718
        // Predicated region
        $region69: #{tpu_custom_call.1} parent=39 // pred_check
          %p720 = pneg %p206
        $region70: #{tpu_custom_call.1} parent=39 // pred_check_branch
          %722 = sbr.rel (%p720) target = $region72
        $region71: #{tpu_custom_call.1} parent=39 // pred_region
          %s723 = smul.u32 %s30, %s31
          %s724 = smul.u32 %s30, %s32
          %s725 = smul.u32 8, %s724
          %s727 = ssub.s32 1024, 1024
          %728 = vsyncadd %s716, %s727
          %s729 = smul.addr %s723, 8
          %s730 = sadd.s32 %s725, %s729
          %s731 = smul.addr %s730, 128
          %s732 = scalar_lea.hbm %s5, %s731
          %s733 = sshll.u32 %s719, 4
          %s734 = int_to_ptr.vmem [resolvable:$true] %s733
          %739 = dma.vmem_to_hbm [thread:$0]  %s734, 1024, %s732, %s716, 128, 128, 8
        $region72: #{tpu_custom_call.1} parent=39 // pred_fallthru
          _
      $region40: #{tpu_custom_call.1} parent=5 // pred_fallthru
        _
      %p740 = scmp.le.s32.totalorder 2, %s20
      // Predicated region
      $region73: #{tpu_custom_call.1} parent=5 // pred_check
        %p741 = pneg %p740
      $region74: #{tpu_custom_call.1} parent=5 // pred_check_branch
        %743 = sbr.rel (%p741) target = $region76
      $region75: #{tpu_custom_call.1} parent=5 // pred_region
        %s744 = ssub.s32 %s20, 2
        // Predicated region
        $region77: #{tpu_custom_call.1} parent=75 // pred_check
          %p745 = pneg %p212
        $region78: #{tpu_custom_call.1} parent=75 // pred_check_branch
          %747 = sbr.rel (%p745) target = $region80
        $region79: #{tpu_custom_call.1} parent=75 // pred_region
          %s748 = sand.u32 %s197, 1
          %s749 = scalar_lea.sflag [#allocation9], %s748
          %s750 = sand.u32 %s197, 1
          %s751 = smul.addr %s750, 64
          %s752 = scalar_lea.vmem [#allocation13], %s751
          %753 = dma.done %s749, 1024
        $region80: #{tpu_custom_call.1} parent=75 // pred_fallthru
          _
      $region76: #{tpu_custom_call.1} parent=5 // pred_fallthru
        _
    $region6: #{tpu_custom_call.1} parent=1 // loop_footer
      %s24 = sadd.s32 1, %s20
    $region7: #{tpu_custom_call.1} parent=1 // loop_footer_branch
      %19 = sbr.rel target = $region3
    $region8: #{tpu_custom_call.1} parent=1 // loop_exit
      _
    %754 = vsyncpa [#allocation8], 1
    %s755 = scalar_lea.sflag [#allocation8], 1
    %756 = vsyncpa %s755, 1
    %757 = vsyncpa [#allocation11], 1
    %s758 = scalar_lea.sflag [#allocation11], 1
    %759 = vsyncpa %s758, 1
    %760 = vsyncpa [#allocation9], 1
    %s761 = scalar_lea.sflag [#allocation9], 1
    %762 = vsyncpa %s761, 1

</llo_original>
